<compile_context>
chip_gen: v7x
topology: tpu7x:2x2x1
jax: 0.10.0
libtpu: 0.0.40
codegen_flags: <defaults>
</compile_context>

<pallas_src>
import jax
import jax.numpy as jnp
from jax.experimental import pallas as pl
from jax.experimental.pallas import tpu as pltpu


def _mlp_kernel(x_ref, w1t_ref, b1_ref, w2t_ref, b2_ref, o_ref):
    # x_ref:   (TB, in_size)
    # w1t_ref: (in_size, hidden)   [pre-transposed once in prepare_params]
    # b1_ref:  (1, hidden)
    # w2t_ref: (hidden, out_size)  [pre-transposed once in prepare_params]
    # b2_ref:  (1, out_size)
    # o_ref:   (TB, out_size)
    x = x_ref[...]
    h = jnp.dot(x, w1t_ref[...], preferred_element_type=jnp.float32)
    h = jnp.maximum(h + b1_ref[...], 0.0)                 # bias + ReLU (fp32)
    y = jnp.dot(h.astype(w2t_ref.dtype), w2t_ref[...],
                preferred_element_type=jnp.float32)
    y = jnp.maximum(y + b2_ref[...], 0.0)                 # bias + ReLU (fp32)
    o_ref[...] = y.astype(o_ref.dtype)


def prepare_params(w1, b1, w2, b2):
    """One-time layout prep (do NOT re-run per forward call).

    PyTorch nn.Linear stores (out, in); the kernel wants (in, out) so the MXU
    contracts (K, N) with no in-kernel weight transpose."""
    hidden, in_size = w1.shape
    out_size = w2.shape[0]
    return (jnp.asarray(w1).T,                       # (in_size, hidden)
            jnp.asarray(b1).reshape(1, hidden),      # (1, hidden)
            jnp.asarray(w2).T,                       # (hidden, out_size)
            jnp.asarray(b2).reshape(1, out_size))    # (1, out_size)


def encoder_feature_linear(x, w1t, b1_2d, w2t, b2_2d, *, block_b=512):
    """x: (B, in_size); params as returned by prepare_params.
    Returns (B, 1, out_size) = ReLU(ReLU(x W1^T + b1) W2^T + b2)[:, None, :]."""
    B, in_size = x.shape
    in_size_w, hidden = w1t.shape
    hidden_w, out_size = w2t.shape
    assert in_size == in_size_w and hidden == hidden_w

    # --- batch tiling --------------------------------------------------------
    sub = 16 if x.dtype == jnp.bfloat16 else 8     # sublane packing
    tb = min(block_b, B)
    if B > sub:
        # Keep at least 2 grid steps (both v7x TensorCores get work); no-op on
        # single-TC v5e/v6e.
        half = (pl.cdiv(B, 2) // sub) * sub
        if half >= sub:
            tb = min(tb, half)
        if tb > sub:
            tb = (tb // sub) * sub                 # sublane-align
        tb = max(tb, sub)
    else:
        tb = B                                     # tiny batch: single full block
    grid = (pl.cdiv(B, tb),)

    # --- VMEM budget: derived bytes + modest headroom (no double counting) ---
    itemsize = jnp.dtype(x.dtype).itemsize
    io_bytes = 2 * tb * (in_size + out_size) * itemsize          # double-buffered x / out
    weight_bytes = 2 * (in_size * hidden + hidden * out_size
                        + hidden + out_size) * itemsize          # resident (2 bufs alloc'd)
    scratch_bytes = tb * (hidden + out_size) * 4                 # fp32 intermediates
    vmem_limit = int(io_bytes + weight_bytes + scratch_bytes + (8 << 20))

    flops = 2 * B * in_size * hidden + 2 * B * hidden * out_size
    bytes_accessed = itemsize * (B * in_size + B * out_size
                                 + in_size * hidden + hidden * out_size
                                 + hidden + out_size)
    cost = pl.CostEstimate(flops=flops, transcendentals=0,
                           bytes_accessed=bytes_accessed)

    out = pl.pallas_call(
        _mlp_kernel,
        out_shape=jax.ShapeDtypeStruct((B, out_size), x.dtype),
        grid=grid,
        in_specs=[
            pl.BlockSpec((tb, in_size), lambda i: (i, 0)),        # x: tiled over batch
            pl.BlockSpec((in_size, hidden), lambda i: (0, 0)),    # W1^T: resident
            pl.BlockSpec((1, hidden), lambda i: (0, 0)),          # b1: resident
            pl.BlockSpec((hidden, out_size), lambda i: (0, 0)),   # W2^T: resident
            pl.BlockSpec((1, out_size), lambda i: (0, 0)),        # b2: resident
        ],
        out_specs=pl.BlockSpec((tb, out_size), lambda i: (i, 0)), # unpadded output
        compiler_params=pltpu.CompilerParams(
            dimension_semantics=("parallel",),                    # megacore on v7x
            vmem_limit_bytes=vmem_limit),
        cost_estimate=cost,
    )(x, w1t, b1_2d, w2t, b2_2d)

    # torch.unsqueeze(x, dim=1) — a free reshape, no slicing / copying needed.
    return out[:, None, :]


def _torch_linear_init(key, fan_out, fan_in, dtype=jnp.float32):
    """Deterministic init mimicking nn.Linear defaults: U(-1/sqrt(fan_in), 1/sqrt(fan_in))."""
    kw, kb = jax.random.split(key)
    bound = 1.0 / jnp.sqrt(jnp.asarray(fan_in, dtype))
    w = jax.random.uniform(kw, (fan_out, fan_in), dtype, minval=-bound, maxval=bound)
    b = jax.random.uniform(kb, (fan_out,), dtype, minval=-bound, maxval=bound)
    return w, b


def _reference(x, w1, b1, w2, b2):
    h = jnp.maximum(x @ w1.T + b1, 0.0)
    return jnp.maximum(h @ w2.T + b2, 0.0)[:, None, :]


if __name__ == "__main__":
    key = jax.random.PRNGKey(0)
    k_x, k_l1, k_l2, k_x2 = jax.random.split(key, 4)

    # Shapes consistent with the module's forward:
    # in_size=32 -> hidden=4*out=64 -> out_size=16.
    in_size = 32
    out_size = 16
    hidden = out_size * 4

    w1, b1 = _torch_linear_init(k_l1, hidden, in_size)      # linear1: in -> 4*out
    w2, b2 = _torch_linear_init(k_l2, out_size, hidden)     # linear2: 4*out -> out

    # One-time parameter layout prep (hoisted out of the per-call path).
    params = prepare_params(w1, b1, w2, b2)

    fn = jax.jit(encoder_feature_linear)

    # Main check: batch multiple of the tile.
    B = 512
    x = jax.random.normal(k_x, (B, in_size), dtype=jnp.float32)
    y = jax.block_until_ready(fn(x, *params))
    assert y.shape == (B, 1, out_size)
    assert jnp.allclose(y, _reference(x, w1, b1, w2, b2), atol=1e-4, rtol=1e-4)

    # Non-tile-aligned batch: exercises Pallas' masked partial final block.
    B2 = 200
    x2 = jax.random.normal(k_x2, (B2, in_size), dtype=jnp.float32)
    y2 = jax.block_until_ready(fn(x2, *params))
    assert y2.shape == (B2, 1, out_size)
    assert jnp.allclose(y2, _reference(x2, w1, b1, w2, b2), atol=1e-4, rtol=1e-4)

    print("KERNEL_OK")
</pallas_src>

<mosaic_0001>
module attributes {stable_mosaic.version = 11 : i64} {
  func.func @_mlp_kernel(%arg0: i32, %arg1: memref<256x32xf32, #tpu.memory_space<vmem>>, %arg2: memref<32x64xf32, #tpu.memory_space<vmem>>, %arg3: memref<1x64xf32, #tpu.memory_space<vmem>>, %arg4: memref<64x16xf32, #tpu.memory_space<vmem>>, %arg5: memref<1x16xf32, #tpu.memory_space<vmem>>, %arg6: memref<256x16xf32, #tpu.memory_space<vmem>>) attributes {dimension_semantics = [#tpu.dimension_semantics<parallel>], iteration_bounds = array<i64: 2>, scalar_prefetch = 0 : i64, scratch_operands = 0 : i64, tpu.core_type = #tpu.core_type<tc>, window_params = [{transform_indices = @transform_0, window_bounds = array<i64: 256, 32>}, {pipeline_mode = #tpu.pipeline_mode<synchronous>, transform_indices = @transform_1, window_bounds = array<i64: 32, 64>}, {pipeline_mode = #tpu.pipeline_mode<synchronous>, transform_indices = @transform_2, window_bounds = array<i64: 1, 64>}, {pipeline_mode = #tpu.pipeline_mode<synchronous>, transform_indices = @transform_3, window_bounds = array<i64: 64, 16>}, {pipeline_mode = #tpu.pipeline_mode<synchronous>, transform_indices = @transform_4, window_bounds = array<i64: 1, 16>}, {transform_indices = @transform_5, window_bounds = array<i64: 256, 16>}]} {
    %c0 = arith.constant 0 : index
    %c0_0 = arith.constant 0 : index
    %0 = vector.load %arg1[%c0, %c0_0] : memref<256x32xf32, #tpu.memory_space<vmem>>, vector<256x32xf32>
    %c0_1 = arith.constant 0 : index
    %c0_2 = arith.constant 0 : index
    %1 = vector.load %arg2[%c0_1, %c0_2] : memref<32x64xf32, #tpu.memory_space<vmem>>, vector<32x64xf32>
    %cst = arith.constant dense<0.000000e+00> : vector<256x64xf32>
    %2 = tpu.matmul %0, %1, %cst {dimension_numbers = #tpu.dot_dimension_numbers<[1], [0], [0], [1], [0, 0, 1, 1], [], []>} : vector<256x32xf32>, vector<32x64xf32>, vector<256x64xf32> -> vector<256x64xf32>
    %c0_3 = arith.constant 0 : index
    %c0_4 = arith.constant 0 : index
    %3 = vector.load %arg3[%c0_3, %c0_4] : memref<1x64xf32, #tpu.memory_space<vmem>>, vector<1x64xf32>
    %4 = vector.broadcast %3 : vector<1x64xf32> to vector<256x64xf32>
    %5 = arith.addf %2, %4 : vector<256x64xf32>
    %cst_5 = arith.constant 0.000000e+00 : f32
    %6 = vector.broadcast %cst_5 : f32 to vector<256x64xf32>
    %7 = arith.maximumf %5, %6 : vector<256x64xf32>
    %c0_6 = arith.constant 0 : index
    %c0_7 = arith.constant 0 : index
    %8 = vector.load %arg4[%c0_6, %c0_7] : memref<64x16xf32, #tpu.memory_space<vmem>>, vector<64x16xf32>
    %cst_8 = arith.constant dense<0.000000e+00> : vector<256x16xf32>
    %9 = tpu.matmul %7, %8, %cst_8 {dimension_numbers = #tpu.dot_dimension_numbers<[1], [0], [0], [1], [0, 0, 1, 1], [], []>} : vector<256x64xf32>, vector<64x16xf32>, vector<256x16xf32> -> vector<256x16xf32>
    %c0_9 = arith.constant 0 : index
    %c0_10 = arith.constant 0 : index
    %10 = vector.load %arg5[%c0_9, %c0_10] : memref<1x16xf32, #tpu.memory_space<vmem>>, vector<1x16xf32>
    %11 = vector.broadcast %10 : vector<1x16xf32> to vector<256x16xf32>
    %12 = arith.addf %9, %11 : vector<256x16xf32>
    %cst_11 = arith.constant 0.000000e+00 : f32
    %13 = vector.broadcast %cst_11 : f32 to vector<256x16xf32>
    %14 = arith.maximumf %12, %13 : vector<256x16xf32>
    %c0_12 = arith.constant 0 : index
    %c0_13 = arith.constant 0 : index
    %15 = vector.load %arg6[%c0_12, %c0_13] : memref<256x16xf32, #tpu.memory_space<vmem>>, vector<256x16xf32>
    tpu.vector_store %arg6[%c0_12, %c0_13], %14 {strides = array<i32>} : memref<256x16xf32, #tpu.memory_space<vmem>>, vector<256x16xf32>,
    return
  }
  func.func @transform_0(%arg0: i32) -> (i32, i32) {
    %c0_i32 = arith.constant 0 : i32
    %c0_i32_0 = arith.constant 0 : i32
    return %arg0, %c0_i32 : i32, i32
  }
  func.func @transform_1(%arg0: i32) -> (i32, i32) {
    %c0_i32 = arith.constant 0 : i32
    %c0_i32_0 = arith.constant 0 : i32
    %c0_i32_1 = arith.constant 0 : i32
    return %c0_i32, %c0_i32_0 : i32, i32
  }
  func.func @transform_2(%arg0: i32) -> (i32, i32) {
    %c0_i32 = arith.constant 0 : i32
    %c0_i32_0 = arith.constant 0 : i32
    %c0_i32_1 = arith.constant 0 : i32
    return %c0_i32, %c0_i32_0 : i32, i32
  }
  func.func @transform_3(%arg0: i32) -> (i32, i32) {
    %c0_i32 = arith.constant 0 : i32
    %c0_i32_0 = arith.constant 0 : i32
    %c0_i32_1 = arith.constant 0 : i32
    return %c0_i32, %c0_i32_0 : i32, i32
  }
  func.func @transform_4(%arg0: i32) -> (i32, i32) {
    %c0_i32 = arith.constant 0 : i32
    %c0_i32_0 = arith.constant 0 : i32
    %c0_i32_1 = arith.constant 0 : i32
    return %c0_i32, %c0_i32_0 : i32, i32
  }
  func.func @transform_5(%arg0: i32) -> (i32, i32) {
    %c0_i32 = arith.constant 0 : i32
    %c0_i32_0 = arith.constant 0 : i32
    return %arg0, %c0_i32 : i32, i32
  }
}

</mosaic_0001>

<llo_original>
// kernel: encoder_feature_linear.1
$region0: #{encoder_feature_linear.1}
  #allocation0 [shape = 'u32[]', space=smem, size = 0x4, offset = 0x4, fixed_abs, tag = 'smem constant byte address 0x4 - core index']
  #allocation1 [shape = 'u32[144,128]{1,0:T(1,128)}', space=vmem, size = 0x12000, scoped, tag = 'internal scratch']
  %s0 = inlined_call_operand.vmem [shape: f32[512,32], index: 0, kind: input, shape index: {}]
  %s1 = inlined_call_operand.vmem [shape: f32[32,64], index: 1, kind: input, shape index: {}]
  %s2 = inlined_call_operand.vmem [shape: f32[1,64], index: 2, kind: input, shape index: {}]
  %s3 = inlined_call_operand.vmem [shape: f32[64,16], index: 3, kind: input, shape index: {}]
  %s4 = inlined_call_operand.vmem [shape: f32[1,16], index: 4, kind: input, shape index: {}]
  %s5 = inlined_call_operand.vmem [shape: f32[512,16], index: 5, kind: output, shape index: {}]
  %s6 = sld [smem:[#allocation0]]
  $region53: #{encoder_feature_linear.1} parent=0
    _
  %s8 = ssub.s32 1, %s6
  %s9 = scalar_select 0, %s8, %s6
  loop: start=0, step=1, limit=4
  $region2: #{encoder_feature_linear.1} parent=0 // loop_pre_header
    _
  $region3: #{encoder_feature_linear.1} parent=0 // loop_header
    %s11 = sphi 0, %s15
    %p12 = scmp.ge.s32.totalorder %s11, 4
    %s21 = sphi 0, %s23
    %s24 = sphi 0, %s21
    %s25 = sphi 0, %s24
    %s41 = sphi 0, %s25
    %s45 = sphi 0, %s45
    %s47 = sphi 0, %s45
    %s48 = sphi 0, %s47
    %s62 = sphi 0, %s48
    %s66 = sphi 0, %s66
    %s68 = sphi 0, %s66
    %s69 = sphi 0, %s68
    %s83 = sphi 0, %s69
    %s87 = sphi 0, %s87
    %s89 = sphi 0, %s87
    %s90 = sphi 0, %s89
    %s104 = sphi 0, %s90
    %s108 = sphi 0, %s108
    %s110 = sphi 0, %s108
    %s111 = sphi 0, %s110
    %s125 = sphi 0, %s111
    %s131 = sphi 0, %s133
    %s134 = sphi 0, %s131
    %s135 = sphi 0, %s134
    %s151 = sphi 0, %s135
  $region4: #{encoder_feature_linear.1} parent=0 // loop_header_branch
    %14 = sbr.rel (%p12) target = $region8
  $region5: #{encoder_feature_linear.1} parent=0 // loop_body
    %s16 = ssub.s32 %s11, 1
    %s17 = ssub.s32 %s11, 2
    %s18 = sadd.s32 %s11, 1
    %s19 = ssub.s32 %s11, %s18
    %p20 = scmp.eq.s32.totalorder %s19, 0
    %s22 = sadd.s32 %s21, 1
    %s23 = scalar_select %p20, %s21, %s22
    %p26 = pneg %p20
    %p27 = scmp.eq.s32.totalorder %s11, 1
    %p28 = por %p26, %p27
    %p29 = scmp.ne.s32.totalorder %s21, %s24
    %p30 = scmp.eq.s32.totalorder %s11, 0
    %p31 = por %p29, %p30
    %p32 = scmp.ne.s32.totalorder %s21, %s24
    %p33 = scmp.eq.s32.totalorder %s16, 1
    %p34 = por %p32, %p33
    %p35 = scmp.ne.s32.totalorder %s24, %s25
    %p36 = scmp.eq.s32.totalorder %s16, 0
    %p37 = por %p35, %p36
    %p38 = scmp.ne.s32.totalorder %s24, %s25
    %p39 = scmp.eq.s32.totalorder %s17, 1
    %p40 = por %p38, %p39
    %p42 = scmp.ne.s32.totalorder %s25, %s41
    %p43 = scmp.eq.s32.totalorder %s17, 0
    %p44 = por %p42, %p43
    %s46 = sadd.s32 %s45, 1
    %p49 = scmp.eq.s32.totalorder %s11, 1
    %p50 = scmp.ne.s32.totalorder %s45, %s47
    %p51 = scmp.eq.s32.totalorder %s11, 0
    %p52 = por %p50, %p51
    %p53 = scmp.ne.s32.totalorder %s45, %s47
    %p54 = scmp.eq.s32.totalorder %s16, 1
    %p55 = por %p53, %p54
    %p56 = scmp.ne.s32.totalorder %s47, %s48
    %p57 = scmp.eq.s32.totalorder %s16, 0
    %p58 = por %p56, %p57
    %p59 = scmp.ne.s32.totalorder %s47, %s48
    %p60 = scmp.eq.s32.totalorder %s17, 1
    %p61 = por %p59, %p60
    %p63 = scmp.ne.s32.totalorder %s48, %s62
    %p64 = scmp.eq.s32.totalorder %s17, 0
    %p65 = por %p63, %p64
    %s67 = sadd.s32 %s66, 1
    %p70 = scmp.eq.s32.totalorder %s11, 1
    %p71 = scmp.ne.s32.totalorder %s66, %s68
    %p72 = scmp.eq.s32.totalorder %s11, 0
    %p73 = por %p71, %p72
    %p74 = scmp.ne.s32.totalorder %s66, %s68
    %p75 = scmp.eq.s32.totalorder %s16, 1
    %p76 = por %p74, %p75
    %p77 = scmp.ne.s32.totalorder %s68, %s69
    %p78 = scmp.eq.s32.totalorder %s16, 0
    %p79 = por %p77, %p78
    %p80 = scmp.ne.s32.totalorder %s68, %s69
    %p81 = scmp.eq.s32.totalorder %s17, 1
    %p82 = por %p80, %p81
    %p84 = scmp.ne.s32.totalorder %s69, %s83
    %p85 = scmp.eq.s32.totalorder %s17, 0
    %p86 = por %p84, %p85
    %s88 = sadd.s32 %s87, 1
    %p91 = scmp.eq.s32.totalorder %s11, 1
    %p92 = scmp.ne.s32.totalorder %s87, %s89
    %p93 = scmp.eq.s32.totalorder %s11, 0
    %p94 = por %p92, %p93
    %p95 = scmp.ne.s32.totalorder %s87, %s89
    %p96 = scmp.eq.s32.totalorder %s16, 1
    %p97 = por %p95, %p96
    %p98 = scmp.ne.s32.totalorder %s89, %s90
    %p99 = scmp.eq.s32.totalorder %s16, 0
    %p100 = por %p98, %p99
    %p101 = scmp.ne.s32.totalorder %s89, %s90
    %p102 = scmp.eq.s32.totalorder %s17, 1
    %p103 = por %p101, %p102
    %p105 = scmp.ne.s32.totalorder %s90, %s104
    %p106 = scmp.eq.s32.totalorder %s17, 0
    %p107 = por %p105, %p106
    %s109 = sadd.s32 %s108, 1
    %p112 = scmp.eq.s32.totalorder %s11, 1
    %p113 = scmp.ne.s32.totalorder %s108, %s110
    %p114 = scmp.eq.s32.totalorder %s11, 0
    %p115 = por %p113, %p114
    %p116 = scmp.ne.s32.totalorder %s108, %s110
    %p117 = scmp.eq.s32.totalorder %s16, 1
    %p118 = por %p116, %p117
    %p119 = scmp.ne.s32.totalorder %s110, %s111
    %p120 = scmp.eq.s32.totalorder %s16, 0
    %p121 = por %p119, %p120
    %p122 = scmp.ne.s32.totalorder %s110, %s111
    %p123 = scmp.eq.s32.totalorder %s17, 1
    %p124 = por %p122, %p123
    %p126 = scmp.ne.s32.totalorder %s111, %s125
    %p127 = scmp.eq.s32.totalorder %s17, 0
    %p128 = por %p126, %p127
    %s129 = ssub.s32 %s11, %s18
    %p130 = scmp.eq.s32.totalorder %s129, 0
    %s132 = sadd.s32 %s131, 1
    %s133 = scalar_select %p130, %s131, %s132
    %p136 = pneg %p130
    %p137 = scmp.eq.s32.totalorder %s11, 1
    %p138 = por %p136, %p137
    %p139 = scmp.ne.s32.totalorder %s131, %s134
    %p140 = scmp.eq.s32.totalorder %s11, 0
    %p141 = por %p139, %p140
    %p142 = scmp.ne.s32.totalorder %s131, %s134
    %p143 = scmp.eq.s32.totalorder %s16, 1
    %p144 = por %p142, %p143
    %p145 = scmp.ne.s32.totalorder %s134, %s135
    %p146 = scmp.eq.s32.totalorder %s16, 0
    %p147 = por %p145, %p146
    %p148 = scmp.ne.s32.totalorder %s134, %s135
    %p149 = scmp.eq.s32.totalorder %s17, 1
    %p150 = por %p148, %p149
    %p152 = scmp.ne.s32.totalorder %s135, %s151
    %p153 = scmp.eq.s32.totalorder %s17, 0
    %p154 = por %p152, %p153
    %p155 = scmp.le.s32.totalorder 1, %s11
    %p156 = scmp.lt.s32.totalorder %s11, 3
    %p157 = pnand %p155, %p156
    %p158 = pneg %p157
    // Predicated region
    $region9: #{encoder_feature_linear.1} parent=5 // pred_check
      _
    $region10: #{encoder_feature_linear.1} parent=5 // pred_check_branch
      %160 = sbr.rel (%p157) target = $region12
    $region11: #{encoder_feature_linear.1} parent=5 // pred_region
      %s161 = ssub.s32 %s11, 1
      // Predicated region
      $region13: #{encoder_feature_linear.1} parent=11 // pred_check
        %p162 = pneg %p58
      $region14: #{encoder_feature_linear.1} parent=11 // pred_check_branch
        %164 = sbr.rel (%p162) target = $region16
      $region15: #{encoder_feature_linear.1} parent=11 // pred_region
        _
      $region16: #{encoder_feature_linear.1} parent=11 // pred_fallthru
        _
      // Predicated region
      $region17: #{encoder_feature_linear.1} parent=11 // pred_check
        %p165 = pneg %p79
      $region18: #{encoder_feature_linear.1} parent=11 // pred_check_branch
        %167 = sbr.rel (%p165) target = $region20
      $region19: #{encoder_feature_linear.1} parent=11 // pred_region
        _
      $region20: #{encoder_feature_linear.1} parent=11 // pred_fallthru
        _
      // Predicated region
      $region21: #{encoder_feature_linear.1} parent=11 // pred_check
        %p168 = pneg %p100
      $region22: #{encoder_feature_linear.1} parent=11 // pred_check_branch
        %170 = sbr.rel (%p168) target = $region24
      $region23: #{encoder_feature_linear.1} parent=11 // pred_region
        _
      $region24: #{encoder_feature_linear.1} parent=11 // pred_fallthru
        _
      // Predicated region
      $region25: #{encoder_feature_linear.1} parent=11 // pred_check
        %p171 = pneg %p121
      $region26: #{encoder_feature_linear.1} parent=11 // pred_check_branch
        %173 = sbr.rel (%p171) target = $region28
      $region27: #{encoder_feature_linear.1} parent=11 // pred_region
        _
      $region28: #{encoder_feature_linear.1} parent=11 // pred_fallthru
        _
    $region12: #{encoder_feature_linear.1} parent=5 // pred_fallthru
      _
    %p174 = scmp.lt.s32.totalorder %s11, 2
    // Predicated region
    $region29: #{encoder_feature_linear.1} parent=5 // pred_check
      %p175 = pneg %p174
    $region30: #{encoder_feature_linear.1} parent=5 // pred_check_branch
      %177 = sbr.rel (%p175) target = $region32
    $region31: #{encoder_feature_linear.1} parent=5 // pred_region
      // Predicated region
      $region33: #{encoder_feature_linear.1} parent=31 // pred_check
        %p178 = pneg %p31
      $region34: #{encoder_feature_linear.1} parent=31 // pred_check_branch
        %180 = sbr.rel (%p178) target = $region36
      $region35: #{encoder_feature_linear.1} parent=31 // pred_region
        %s181 = smul.u32 32, %s11
        %p182 = scmp.lt.s32.totalorder %s181, 63
        %s183 = scalar_select %p182, %s181, 63
        %s184 = smul.addr %s183, 8
        %s185 = scalar_lea.vmem %s0, %s184
        %s186 = smul.u32 32, %s11
      $region36: #{encoder_feature_linear.1} parent=31 // pred_fallthru
        _
    $region32: #{encoder_feature_linear.1} parent=5 // pred_fallthru
      _
    %p187 = scmp.le.s32.totalorder 1, %s11
    %p188 = scmp.lt.s32.totalorder %s11, 3
    %p189 = pnand %p187, %p188
    %p190 = pneg %p189
    // Predicated region
    $region37: #{encoder_feature_linear.1} parent=5 // pred_check
      _
    $region38: #{encoder_feature_linear.1} parent=5 // pred_check_branch
      %192 = sbr.rel (%p189) target = $region40
    $region39: #{encoder_feature_linear.1} parent=5 // pred_region
      %s193 = ssub.s32 %s11, 1
      %s194 = smul.u32 32, %s16
      %p195 = scmp.lt.s32.totalorder %s194, 63
      %s196 = scalar_select %p195, %s194, 63
      %s197 = smul.addr %s196, 8
      %s198 = scalar_lea.vmem %s0, %s197
      %p199 = pneg %p37
      %p200 = pneg %p34
      %p201 = pneg %p58
      %p202 = pneg %p55
      %p203 = pneg %p79
      %p204 = pneg %p76
      %p205 = pneg %p100
      %p206 = pneg %p97
      %p207 = pneg %p121
      %p208 = pneg %p118
      %p209 = pneg %p147
      %p210 = pneg %p144
      %s211 = smul.u32 32, %s16
      %p212 = scmp.lt.s32.totalorder %s211, 63
      %s213 = scalar_select %p212, %s211, 63
      %s214 = smul.addr %s213, 8
      %s215 = scalar_lea.vmem %s5, %s214
      %s216 = smul.u32 32, %s16
      %p217 = scmp.lt.s32.totalorder %s216, 63
      %s218 = scalar_select %p217, %s216, 63
      %s219 = smul.addr %s218, 8
      %s220 = scalar_lea.vmem %s0, %s219
      %s221 = smul.u32 32, %s16
      %s222 = smul.u32 32, %s16
      %p223 = scmp.lt.s32.totalorder %s222, 63
      %s224 = scalar_select %p223, %s222, 63
      %s225 = smul.addr %s224, 8
      %s226 = scalar_lea.vmem %s5, %s225
      %s227 = smul.u32 32, %s16
      %v228 = vld [vmem:[%s220] sm:$0xff]
      %v229 = vld [vmem:[%s220 + $0x8] sm:$0xff]
      %v230 = vld [vmem:[%s220 + $0x10] sm:$0xff]
      %v231 = vld [vmem:[%s220 + $0x18] sm:$0xff]
      %v232 = vld [vmem:[%s220 + $0x20] sm:$0xff]
      %v233 = vld [vmem:[%s220 + $0x28] sm:$0xff]
      %v234 = vld [vmem:[%s220 + $0x30] sm:$0xff]
      %v235 = vld [vmem:[%s220 + $0x38] sm:$0xff]
      %v236 = vld [vmem:[%s220 + $0x40] sm:$0xff]
      %v237 = vld [vmem:[%s220 + $0x48] sm:$0xff]
      %v238 = vld [vmem:[%s220 + $0x50] sm:$0xff]
      %v239 = vld [vmem:[%s220 + $0x58] sm:$0xff]
      %v240 = vld [vmem:[%s220 + $0x60] sm:$0xff]
      %v241 = vld [vmem:[%s220 + $0x68] sm:$0xff]
      %v242 = vld [vmem:[%s220 + $0x70] sm:$0xff]
      %v243 = vld [vmem:[%s220 + $0x78] sm:$0xff]
      %v244 = vld [vmem:[%s220 + $0x80] sm:$0xff]
      %v245 = vld [vmem:[%s220 + $0x88] sm:$0xff]
      %v246 = vld [vmem:[%s220 + $0x90] sm:$0xff]
      %v247 = vld [vmem:[%s220 + $0x98] sm:$0xff]
      %v248 = vld [vmem:[%s220 + $0xa0] sm:$0xff]
      %v249 = vld [vmem:[%s220 + $0xa8] sm:$0xff]
      %v250 = vld [vmem:[%s220 + $0xb0] sm:$0xff]
      %v251 = vld [vmem:[%s220 + $0xb8] sm:$0xff]
      %v252 = vld [vmem:[%s220 + $0xc0] sm:$0xff]
      %v253 = vld [vmem:[%s220 + $0xc8] sm:$0xff]
      %v254 = vld [vmem:[%s220 + $0xd0] sm:$0xff]
      %v255 = vld [vmem:[%s220 + $0xd8] sm:$0xff]
      %v256 = vld [vmem:[%s220 + $0xe0] sm:$0xff]
      %v257 = vld [vmem:[%s220 + $0xe8] sm:$0xff]
      %v258 = vld [vmem:[%s220 + $0xf0] sm:$0xff]
      %v259 = vld [vmem:[%s220 + $0xf8] sm:$0xff]
      %v260 = vld [vmem:[%s1] sm:$0xff]
      %v261 = vld [vmem:[%s1 + $0x8] sm:$0xff]
      %v262 = vld [vmem:[%s1 + $0x10] sm:$0xff]
      %v263 = vld [vmem:[%s1 + $0x18] sm:$0xff]
      %v264 = vld [vmem:[%s2] sm:$0x1]
      %v266 = vlaneseq
      %v267 = vshrl.u32 %v266, 7
      %v268 = vsub.s32 0, %v267
      %v269 = vrot.slane %v264, %v268
      %vm271 = vcmask 261120
      %v273 = vsel %vm271, %v228, 0
      %v276 = vsel %vm271, %v229, 0
      %v279 = vsel %vm271, %v230, 0
      %v282 = vsel %vm271, %v231, 0
      %v285 = vsel %vm271, %v232, 0
      %v288 = vsel %vm271, %v233, 0
      %v291 = vsel %vm271, %v234, 0
      %v294 = vsel %vm271, %v235, 0
      %v297 = vsel %vm271, %v236, 0
      %v300 = vsel %vm271, %v237, 0
      %v303 = vsel %vm271, %v238, 0
      %v306 = vsel %vm271, %v239, 0
      %v309 = vsel %vm271, %v240, 0
      %v312 = vsel %vm271, %v241, 0
      %v315 = vsel %vm271, %v242, 0
      %v318 = vsel %vm271, %v243, 0
      %v321 = vsel %vm271, %v244, 0
      %v324 = vsel %vm271, %v245, 0
      %v327 = vsel %vm271, %v246, 0
      %v330 = vsel %vm271, %v247, 0
      %v333 = vsel %vm271, %v248, 0
      %v336 = vsel %vm271, %v249, 0
      %v339 = vsel %vm271, %v250, 0
      %v342 = vsel %vm271, %v251, 0
      %v345 = vsel %vm271, %v252, 0
      %v348 = vsel %vm271, %v253, 0
      %v351 = vsel %vm271, %v254, 0
      %v354 = vsel %vm271, %v255, 0
      %v357 = vsel %vm271, %v256, 0
      %v360 = vsel %vm271, %v257, 0
      %v363 = vsel %vm271, %v258, 0
      %v366 = vsel %vm271, %v259, 0
      %368 = vmatprep.subr.mxu0 0.0
      %369 = vmatpush1.msra.mxu0 %v260
      %370 = vmatprep.subr.mxu0 0.0
      %371 = vmatpush1.msra.mxu0 %v261
      %372 = vmatprep.subr.mxu0 0.0
      %373 = vmatpush1.msra.mxu0 %v262
      %374 = vmatprep.subr.mxu0 0.0
      %375 = vmatpush1.msra.mxu0 %v263
      %376 = vmatprep.subr.mxu0 0.0
      %377 = vmatpush1.msra.mxu0 0.0
      %378 = vmatprep.subr.mxu0 0.0
      %379 = vmatpush1.msra.mxu0 0.0
      %380 = vmatprep.subr.mxu0 0.0
      %381 = vmatpush1.msra.mxu0 0.0
      %382 = vmatprep.subr.mxu0 0.0
      %383 = vmatpush1.msra.mxu0 0.0
      %384 = vmatprep.subr.mxu0 0.0
      %385 = vmatpush1.msra.mxu0 0.0
      %386 = vmatprep.subr.mxu0 0.0
      %387 = vmatpush1.msra.mxu0 0.0
      %388 = vmatprep.subr.mxu0 0.0
      %389 = vmatpush1.msra.mxu0 0.0
      %390 = vmatprep.subr.mxu0 0.0
      %391 = vmatpush1.msra.mxu0 0.0
      %392 = vmatprep.subr.mxu0 0.0
      %393 = vmatpush1.msra.mxu0 0.0
      %394 = vmatprep.subr.mxu0 0.0
      %395 = vmatpush1.msra.mxu0 0.0
      %396 = vmatprep.subr.mxu0 0.0
      %397 = vmatpush1.msra.mxu0 0.0
      %398 = vmatprep.subr.mxu0 0.0
      %399 = vmatpush1.msra.mxu0 0.0
      %400 = vmatprep.subr.mxu0 0.0
      %401 = vmatpush1.msra.mxu0 0.0
      %402 = vmatprep.subr.mxu0 0.0
      %403 = vmatpush1.msra.mxu0 0.0
      %404 = vmatprep.subr.mxu0 0.0
      %405 = vmatpush1.msra.mxu0 0.0
      %406 = vmatprep.subr.mxu0 0.0
      %407 = vmatpush1.msra.mxu0 0.0
      %408 = vmatprep.subr.mxu0 0.0
      %409 = vmatpush1.msra.mxu0 0.0
      %410 = vmatprep.subr.mxu0 0.0
      %411 = vmatpush1.msra.mxu0 0.0
      %412 = vmatprep.subr.mxu0 0.0
      %413 = vmatpush1.msra.mxu0 0.0
      %414 = vmatprep.subr.mxu0 0.0
      %415 = vmatpush1.msra.mxu0 0.0
      %416 = vmatprep.subr.mxu0 0.0
      %417 = vmatpush1.msra.mxu0 0.0
      %418 = vmatprep.subr.mxu0 0.0
      %419 = vmatpush1.msra.mxu0 0.0
      %420 = vmatprep.subr.mxu0 0.0
      %421 = vmatpush1.msra.mxu0 0.0
      %422 = vmatprep.subr.mxu0 0.0
      %423 = vmatpush1.msra.mxu0 0.0
      %424 = vmatprep.subr.mxu0 0.0
      %425 = vmatpush1.msra.mxu0 0.0
      %426 = vmatprep.subr.mxu0 0.0
      %427 = vmatpush1.msra.mxu0 0.0
      %428 = vmatprep.subr.mxu0 0.0
      %429 = vmatpush1.msra.mxu0 0.0
      %430 = vmatprep.subr.mxu0 0.0
      %431 = vmatpush1.msra.mxu0 0.0
      %432 = vmatprep.mubr.f32.mxu0 0.0
      %433 = vmatmul.mubr.f32.gmra.mrb[0].mxu0 %v273
      %v434 = vpop.f32.mrb[0].mxu0
      %v435 = vadd.f32 %v269, %v434
      %v436 = vpop.f32.mrb[0].mxu0
      %437 = vmatprep.mubr.f32.mxu0 0.0
      %438 = vmatmul.mubr.f32.gmra.mrb[0].mxu0 %v276
      %v439 = vpop.f32.mrb[0].mxu0
      %v440 = vadd.f32 %v269, %v439
      %v441 = vpop.f32.mrb[0].mxu0
      %442 = vmatprep.mubr.f32.mxu0 0.0
      %443 = vmatmul.mubr.f32.gmra.mrb[0].mxu0 %v279
      %v444 = vpop.f32.mrb[0].mxu0
      %v445 = vadd.f32 %v269, %v444
      %v446 = vpop.f32.mrb[0].mxu0
      %447 = vmatprep.mubr.f32.mxu0 0.0
      %448 = vmatmul.mubr.f32.gmra.mrb[0].mxu0 %v282
      %v449 = vpop.f32.mrb[0].mxu0
      %v450 = vadd.f32 %v269, %v449
      %v451 = vpop.f32.mrb[0].mxu0
      %452 = vmatprep.mubr.f32.mxu0 0.0
      %453 = vmatmul.mubr.f32.gmra.mrb[0].mxu0 %v285
      %v454 = vpop.f32.mrb[0].mxu0
      %v455 = vadd.f32 %v269, %v454
      %v456 = vpop.f32.mrb[0].mxu0
      %457 = vmatprep.mubr.f32.mxu0 0.0
      %458 = vmatmul.mubr.f32.gmra.mrb[0].mxu0 %v288
      %v459 = vpop.f32.mrb[0].mxu0
      %v460 = vadd.f32 %v269, %v459
      %v461 = vpop.f32.mrb[0].mxu0
      %462 = vmatprep.mubr.f32.mxu0 0.0
      %463 = vmatmul.mubr.f32.gmra.mrb[0].mxu0 %v291
      %v464 = vpop.f32.mrb[0].mxu0
      %v465 = vadd.f32 %v269, %v464
      %v466 = vpop.f32.mrb[0].mxu0
      %467 = vmatprep.mubr.f32.mxu0 0.0
      %468 = vmatmul.mubr.f32.gmra.mrb[0].mxu0 %v294
      %v469 = vpop.f32.mrb[0].mxu0
      %v470 = vadd.f32 %v269, %v469
      %v471 = vpop.f32.mrb[0].mxu0
      %472 = vmatprep.mubr.f32.mxu0 0.0
      %473 = vmatmul.mubr.f32.gmra.mrb[0].mxu0 %v297
      %v474 = vpop.f32.mrb[0].mxu0
      %v475 = vadd.f32 %v269, %v474
      %v476 = vpop.f32.mrb[0].mxu0
      %477 = vmatprep.mubr.f32.mxu0 0.0
      %478 = vmatmul.mubr.f32.gmra.mrb[0].mxu0 %v300
      %v479 = vpop.f32.mrb[0].mxu0
      %v480 = vadd.f32 %v269, %v479
      %v481 = vpop.f32.mrb[0].mxu0
      %482 = vmatprep.mubr.f32.mxu0 0.0
      %483 = vmatmul.mubr.f32.gmra.mrb[0].mxu0 %v303
      %v484 = vpop.f32.mrb[0].mxu0
      %v485 = vadd.f32 %v269, %v484
      %v486 = vpop.f32.mrb[0].mxu0
      %487 = vmatprep.mubr.f32.mxu0 0.0
      %488 = vmatmul.mubr.f32.gmra.mrb[0].mxu0 %v306
      %v489 = vpop.f32.mrb[0].mxu0
      %v490 = vadd.f32 %v269, %v489
      %v491 = vpop.f32.mrb[0].mxu0
      %492 = vmatprep.mubr.f32.mxu0 0.0
      %493 = vmatmul.mubr.f32.gmra.mrb[0].mxu0 %v309
      %v494 = vpop.f32.mrb[0].mxu0
      %v495 = vadd.f32 %v269, %v494
      %v496 = vpop.f32.mrb[0].mxu0
      %497 = vmatprep.mubr.f32.mxu0 0.0
      %498 = vmatmul.mubr.f32.gmra.mrb[0].mxu0 %v312
      %v499 = vpop.f32.mrb[0].mxu0
      %v500 = vadd.f32 %v269, %v499
      %v501 = vpop.f32.mrb[0].mxu0
      %502 = vmatprep.mubr.f32.mxu0 0.0
      %503 = vmatmul.mubr.f32.gmra.mrb[0].mxu0 %v315
      %v504 = vpop.f32.mrb[0].mxu0
      %v505 = vadd.f32 %v269, %v504
      %v506 = vpop.f32.mrb[0].mxu0
      %507 = vmatprep.mubr.f32.mxu0 0.0
      %508 = vmatmul.mubr.f32.gmra.mrb[0].mxu0 %v318
      %v509 = vpop.f32.mrb[0].mxu0
      %v510 = vadd.f32 %v269, %v509
      %v511 = vpop.f32.mrb[0].mxu0
      %512 = vmatprep.mubr.f32.mxu0 0.0
      %513 = vmatmul.mubr.f32.gmra.mrb[0].mxu0 %v321
      %v514 = vpop.f32.mrb[0].mxu0
      %v515 = vadd.f32 %v269, %v514
      %v516 = vpop.f32.mrb[0].mxu0
      %517 = vmatprep.mubr.f32.mxu0 0.0
      %518 = vmatmul.mubr.f32.gmra.mrb[0].mxu0 %v324
      %v519 = vpop.f32.mrb[0].mxu0
      %v520 = vadd.f32 %v269, %v519
      %v521 = vpop.f32.mrb[0].mxu0
      %522 = vmatprep.mubr.f32.mxu0 0.0
      %523 = vmatmul.mubr.f32.gmra.mrb[0].mxu0 %v327
      %v524 = vpop.f32.mrb[0].mxu0
      %v525 = vadd.f32 %v269, %v524
      %v526 = vpop.f32.mrb[0].mxu0
      %527 = vmatprep.mubr.f32.mxu0 0.0
      %528 = vmatmul.mubr.f32.gmra.mrb[0].mxu0 %v330
      %v529 = vpop.f32.mrb[0].mxu0
      %v530 = vadd.f32 %v269, %v529
      %v531 = vpop.f32.mrb[0].mxu0
      %532 = vmatprep.mubr.f32.mxu0 0.0
      %533 = vmatmul.mubr.f32.gmra.mrb[0].mxu0 %v333
      %v534 = vpop.f32.mrb[0].mxu0
      %v535 = vadd.f32 %v269, %v534
      %v536 = vpop.f32.mrb[0].mxu0
      %537 = vmatprep.mubr.f32.mxu0 0.0
      %538 = vmatmul.mubr.f32.gmra.mrb[0].mxu0 %v336
      %v539 = vpop.f32.mrb[0].mxu0
      %v540 = vadd.f32 %v269, %v539
      %v541 = vpop.f32.mrb[0].mxu0
      %542 = vmatprep.mubr.f32.mxu0 0.0
      %543 = vmatmul.mubr.f32.gmra.mrb[0].mxu0 %v339
      %v544 = vpop.f32.mrb[0].mxu0
      %v545 = vadd.f32 %v269, %v544
      %v546 = vpop.f32.mrb[0].mxu0
      %547 = vmatprep.mubr.f32.mxu0 0.0
      %548 = vmatmul.mubr.f32.gmra.mrb[0].mxu0 %v342
      %v549 = vpop.f32.mrb[0].mxu0
      %v550 = vadd.f32 %v269, %v549
      %v551 = vpop.f32.mrb[0].mxu0
      %552 = vmatprep.mubr.f32.mxu0 0.0
      %553 = vmatmul.mubr.f32.gmra.mrb[0].mxu0 %v345
      %v554 = vpop.f32.mrb[0].mxu0
      %v555 = vadd.f32 %v269, %v554
      %v556 = vpop.f32.mrb[0].mxu0
      %557 = vmatprep.mubr.f32.mxu0 0.0
      %558 = vmatmul.mubr.f32.gmra.mrb[0].mxu0 %v348
      %v559 = vpop.f32.mrb[0].mxu0
      %v560 = vadd.f32 %v269, %v559
      %v561 = vpop.f32.mrb[0].mxu0
      %562 = vmatprep.mubr.f32.mxu0 0.0
      %563 = vmatmul.mubr.f32.gmra.mrb[0].mxu0 %v351
      %v564 = vpop.f32.mrb[0].mxu0
      %v565 = vadd.f32 %v269, %v564
      %v566 = vpop.f32.mrb[0].mxu0
      %567 = vmatprep.mubr.f32.mxu0 0.0
      %568 = vmatmul.mubr.f32.gmra.mrb[0].mxu0 %v354
      %v569 = vpop.f32.mrb[0].mxu0
      %v570 = vadd.f32 %v269, %v569
      %v571 = vpop.f32.mrb[0].mxu0
      %572 = vmatprep.mubr.f32.mxu0 0.0
      %573 = vmatmul.mubr.f32.gmra.mrb[0].mxu0 %v357
      %v574 = vpop.f32.mrb[0].mxu0
      %v575 = vadd.f32 %v269, %v574
      %v576 = vpop.f32.mrb[0].mxu0
      %577 = vmatprep.mubr.f32.mxu0 0.0
      %578 = vmatmul.mubr.f32.gmra.mrb[0].mxu0 %v360
      %v579 = vpop.f32.mrb[0].mxu0
      %v580 = vadd.f32 %v269, %v579
      %v581 = vpop.f32.mrb[0].mxu0
      %582 = vmatprep.mubr.f32.mxu0 0.0
      %583 = vmatmul.mubr.f32.gmra.mrb[0].mxu0 %v363
      %v584 = vpop.f32.mrb[0].mxu0
      %v585 = vadd.f32 %v269, %v584
      %v586 = vpop.f32.mrb[0].mxu0
      %587 = vmatprep.mubr.f32.mxu0 0.0
      %588 = vmatmul.mubr.f32.gmra.mrb[0].mxu0 %v366
      %v589 = vpop.f32.mrb[0].mxu0
      %v590 = vadd.f32 %v269, %v589
      %v591 = vpop.f32.mrb[0].mxu0
      %592 = vdwg.mxu0
      %v593 = vmax.f32 %v435, 0.0
      %v594 = vmax.f32 %v440, 0.0
      %v595 = vmax.f32 %v445, 0.0
      %v596 = vmax.f32 %v450, 0.0
      %v597 = vmax.f32 %v455, 0.0
      %v598 = vmax.f32 %v460, 0.0
      %v599 = vmax.f32 %v465, 0.0
      %v600 = vmax.f32 %v470, 0.0
      %v601 = vmax.f32 %v475, 0.0
      %v602 = vmax.f32 %v480, 0.0
      %v603 = vmax.f32 %v485, 0.0
      %v604 = vmax.f32 %v490, 0.0
      %v605 = vmax.f32 %v495, 0.0
      %v606 = vmax.f32 %v500, 0.0
      %v607 = vmax.f32 %v505, 0.0
      %v608 = vmax.f32 %v510, 0.0
      %v609 = vmax.f32 %v515, 0.0
      %v610 = vmax.f32 %v520, 0.0
      %v611 = vmax.f32 %v525, 0.0
      %v612 = vmax.f32 %v530, 0.0
      %v613 = vmax.f32 %v535, 0.0
      %v614 = vmax.f32 %v540, 0.0
      %v615 = vmax.f32 %v545, 0.0
      %v616 = vmax.f32 %v550, 0.0
      %v617 = vmax.f32 %v555, 0.0
      %v618 = vmax.f32 %v560, 0.0
      %v619 = vmax.f32 %v565, 0.0
      %v620 = vmax.f32 %v570, 0.0
      %v621 = vmax.f32 %v575, 0.0
      %v622 = vmax.f32 %v580, 0.0
      %v623 = vmax.f32 %v585, 0.0
      %v624 = vmax.f32 %v590, 0.0
      %v625 = vld [vmem:[%s3] sm:$0xff]
      %v626 = vld [vmem:[%s3 + $0x8] sm:$0xff]
      %v627 = vld [vmem:[%s3 + $0x10] sm:$0xff]
      %v628 = vld [vmem:[%s3 + $0x18] sm:$0xff]
      %v629 = vld [vmem:[%s3 + $0x20] sm:$0xff]
      %v630 = vld [vmem:[%s3 + $0x28] sm:$0xff]
      %v631 = vld [vmem:[%s3 + $0x30] sm:$0xff]
      %v632 = vld [vmem:[%s3 + $0x38] sm:$0xff]
      %v633 = vld [vmem:[%s4] sm:$0x1]
      %v635 = vlaneseq
      %v636 = vshrl.u32 %v635, 7
      %v637 = vsub.s32 0, %v636
      %v638 = vrot.slane %v633, %v637
      %vm640 = vcmask 523264
      %v642 = vsel %vm640, %v593, 0
      %v645 = vsel %vm640, %v594, 0
      %v648 = vsel %vm640, %v595, 0
      %v651 = vsel %vm640, %v596, 0
      %v654 = vsel %vm640, %v597, 0
      %v657 = vsel %vm640, %v598, 0
      %v660 = vsel %vm640, %v599, 0
      %v663 = vsel %vm640, %v600, 0
      %v666 = vsel %vm640, %v601, 0
      %v669 = vsel %vm640, %v602, 0
      %v672 = vsel %vm640, %v603, 0
      %v675 = vsel %vm640, %v604, 0
      %v678 = vsel %vm640, %v605, 0
      %v681 = vsel %vm640, %v606, 0
      %v684 = vsel %vm640, %v607, 0
      %v687 = vsel %vm640, %v608, 0
      %v690 = vsel %vm640, %v609, 0
      %v693 = vsel %vm640, %v610, 0
      %v696 = vsel %vm640, %v611, 0
      %v699 = vsel %vm640, %v612, 0
      %v702 = vsel %vm640, %v613, 0
      %v705 = vsel %vm640, %v614, 0
      %v708 = vsel %vm640, %v615, 0
      %v711 = vsel %vm640, %v616, 0
      %v714 = vsel %vm640, %v617, 0
      %v717 = vsel %vm640, %v618, 0
      %v720 = vsel %vm640, %v619, 0
      %v723 = vsel %vm640, %v620, 0
      %v726 = vsel %vm640, %v621, 0
      %v729 = vsel %vm640, %v622, 0
      %v732 = vsel %vm640, %v623, 0
      %v735 = vsel %vm640, %v624, 0
      %737 = vmatprep.subr.mxu0 0.0
      %738 = vmatpush1.msra.mxu0 %v625
      %739 = vmatprep.subr.mxu0 0.0
      %740 = vmatpush1.msra.mxu0 %v626
      %741 = vmatprep.subr.mxu0 0.0
      %742 = vmatpush1.msra.mxu0 %v627
      %743 = vmatprep.subr.mxu0 0.0
      %744 = vmatpush1.msra.mxu0 %v628
      %745 = vmatprep.subr.mxu0 0.0
      %746 = vmatpush1.msra.mxu0 %v629
      %747 = vmatprep.subr.mxu0 0.0
      %748 = vmatpush1.msra.mxu0 %v630
      %749 = vmatprep.subr.mxu0 0.0
      %750 = vmatpush1.msra.mxu0 %v631
      %751 = vmatprep.subr.mxu0 0.0
      %752 = vmatpush1.msra.mxu0 %v632
      %753 = vmatprep.subr.mxu0 0.0
      %754 = vmatpush1.msra.mxu0 0.0
      %755 = vmatprep.subr.mxu0 0.0
      %756 = vmatpush1.msra.mxu0 0.0
      %757 = vmatprep.subr.mxu0 0.0
      %758 = vmatpush1.msra.mxu0 0.0
      %759 = vmatprep.subr.mxu0 0.0
      %760 = vmatpush1.msra.mxu0 0.0
      %761 = vmatprep.subr.mxu0 0.0
      %762 = vmatpush1.msra.mxu0 0.0
      %763 = vmatprep.subr.mxu0 0.0
      %764 = vmatpush1.msra.mxu0 0.0
      %765 = vmatprep.subr.mxu0 0.0
      %766 = vmatpush1.msra.mxu0 0.0
      %767 = vmatprep.subr.mxu0 0.0
      %768 = vmatpush1.msra.mxu0 0.0
      %769 = vmatprep.subr.mxu0 0.0
      %770 = vmatpush1.msra.mxu0 0.0
      %771 = vmatprep.subr.mxu0 0.0
      %772 = vmatpush1.msra.mxu0 0.0
      %773 = vmatprep.subr.mxu0 0.0
      %774 = vmatpush1.msra.mxu0 0.0
      %775 = vmatprep.subr.mxu0 0.0
      %776 = vmatpush1.msra.mxu0 0.0
      %777 = vmatprep.subr.mxu0 0.0
      %778 = vmatpush1.msra.mxu0 0.0
      %779 = vmatprep.subr.mxu0 0.0
      %780 = vmatpush1.msra.mxu0 0.0
      %781 = vmatprep.subr.mxu0 0.0
      %782 = vmatpush1.msra.mxu0 0.0
      %783 = vmatprep.subr.mxu0 0.0
      %784 = vmatpush1.msra.mxu0 0.0
      %785 = vmatprep.subr.mxu0 0.0
      %786 = vmatpush1.msra.mxu0 0.0
      %787 = vmatprep.subr.mxu0 0.0
      %788 = vmatpush1.msra.mxu0 0.0
      %789 = vmatprep.subr.mxu0 0.0
      %790 = vmatpush1.msra.mxu0 0.0
      %791 = vmatprep.subr.mxu0 0.0
      %792 = vmatpush1.msra.mxu0 0.0
      %793 = vmatprep.subr.mxu0 0.0
      %794 = vmatpush1.msra.mxu0 0.0
      %795 = vmatprep.subr.mxu0 0.0
      %796 = vmatpush1.msra.mxu0 0.0
      %797 = vmatprep.subr.mxu0 0.0
      %798 = vmatpush1.msra.mxu0 0.0
      %799 = vmatprep.subr.mxu0 0.0
      %800 = vmatpush1.msra.mxu0 0.0
      %801 = vmatprep.mubr.f32.mxu0 0.0
      %802 = vmatmul.mubr.f32.gmra.mrb[0].mxu0 %v642
      %v803 = vpop.f32.mrb[0].mxu0
      %v804 = vadd.f32 %v638, %v803
      %v805 = vpop.f32.mrb[0].mxu0
      %806 = vmatprep.mubr.f32.mxu0 0.0
      %807 = vmatmul.mubr.f32.gmra.mrb[0].mxu0 %v645
      %v808 = vpop.f32.mrb[0].mxu0
      %v809 = vadd.f32 %v638, %v808
      %v810 = vpop.f32.mrb[0].mxu0
      %811 = vmatprep.mubr.f32.mxu0 0.0
      %812 = vmatmul.mubr.f32.gmra.mrb[0].mxu0 %v648
      %v813 = vpop.f32.mrb[0].mxu0
      %v814 = vadd.f32 %v638, %v813
      %v815 = vpop.f32.mrb[0].mxu0
      %816 = vmatprep.mubr.f32.mxu0 0.0
      %817 = vmatmul.mubr.f32.gmra.mrb[0].mxu0 %v651
      %v818 = vpop.f32.mrb[0].mxu0
      %v819 = vadd.f32 %v638, %v818
      %v820 = vpop.f32.mrb[0].mxu0
      %821 = vmatprep.mubr.f32.mxu0 0.0
      %822 = vmatmul.mubr.f32.gmra.mrb[0].mxu0 %v654
      %v823 = vpop.f32.mrb[0].mxu0
      %v824 = vadd.f32 %v638, %v823
      %v825 = vpop.f32.mrb[0].mxu0
      %826 = vmatprep.mubr.f32.mxu0 0.0
      %827 = vmatmul.mubr.f32.gmra.mrb[0].mxu0 %v657
      %v828 = vpop.f32.mrb[0].mxu0
      %v829 = vadd.f32 %v638, %v828
      %v830 = vpop.f32.mrb[0].mxu0
      %831 = vmatprep.mubr.f32.mxu0 0.0
      %832 = vmatmul.mubr.f32.gmra.mrb[0].mxu0 %v660
      %v833 = vpop.f32.mrb[0].mxu0
      %v834 = vadd.f32 %v638, %v833
      %v835 = vpop.f32.mrb[0].mxu0
      %836 = vmatprep.mubr.f32.mxu0 0.0
      %837 = vmatmul.mubr.f32.gmra.mrb[0].mxu0 %v663
      %v838 = vpop.f32.mrb[0].mxu0
      %v839 = vadd.f32 %v638, %v838
      %v840 = vpop.f32.mrb[0].mxu0
      %841 = vmatprep.mubr.f32.mxu0 0.0
      %842 = vmatmul.mubr.f32.gmra.mrb[0].mxu0 %v666
      %v843 = vpop.f32.mrb[0].mxu0
      %v844 = vadd.f32 %v638, %v843
      %v845 = vpop.f32.mrb[0].mxu0
      %846 = vmatprep.mubr.f32.mxu0 0.0
      %847 = vmatmul.mubr.f32.gmra.mrb[0].mxu0 %v669
      %v848 = vpop.f32.mrb[0].mxu0
      %v849 = vadd.f32 %v638, %v848
      %v850 = vpop.f32.mrb[0].mxu0
      %851 = vmatprep.mubr.f32.mxu0 0.0
      %852 = vmatmul.mubr.f32.gmra.mrb[0].mxu0 %v672
      %v853 = vpop.f32.mrb[0].mxu0
      %v854 = vadd.f32 %v638, %v853
      %v855 = vpop.f32.mrb[0].mxu0
      %856 = vmatprep.mubr.f32.mxu0 0.0
      %857 = vmatmul.mubr.f32.gmra.mrb[0].mxu0 %v675
      %v858 = vpop.f32.mrb[0].mxu0
      %v859 = vadd.f32 %v638, %v858
      %v860 = vpop.f32.mrb[0].mxu0
      %861 = vmatprep.mubr.f32.mxu0 0.0
      %862 = vmatmul.mubr.f32.gmra.mrb[0].mxu0 %v678
      %v863 = vpop.f32.mrb[0].mxu0
      %v864 = vadd.f32 %v638, %v863
      %v865 = vpop.f32.mrb[0].mxu0
      %866 = vmatprep.mubr.f32.mxu0 0.0
      %867 = vmatmul.mubr.f32.gmra.mrb[0].mxu0 %v681
      %v868 = vpop.f32.mrb[0].mxu0
      %v869 = vadd.f32 %v638, %v868
      %v870 = vpop.f32.mrb[0].mxu0
      %871 = vmatprep.mubr.f32.mxu0 0.0
      %872 = vmatmul.mubr.f32.gmra.mrb[0].mxu0 %v684
      %v873 = vpop.f32.mrb[0].mxu0
      %v874 = vadd.f32 %v638, %v873
      %v875 = vpop.f32.mrb[0].mxu0
      %876 = vmatprep.mubr.f32.mxu0 0.0
      %877 = vmatmul.mubr.f32.gmra.mrb[0].mxu0 %v687
      %v878 = vpop.f32.mrb[0].mxu0
      %v879 = vadd.f32 %v638, %v878
      %v880 = vpop.f32.mrb[0].mxu0
      %881 = vmatprep.mubr.f32.mxu0 0.0
      %882 = vmatmul.mubr.f32.gmra.mrb[0].mxu0 %v690
      %v883 = vpop.f32.mrb[0].mxu0
      %v884 = vadd.f32 %v638, %v883
      %v885 = vpop.f32.mrb[0].mxu0
      %886 = vmatprep.mubr.f32.mxu0 0.0
      %887 = vmatmul.mubr.f32.gmra.mrb[0].mxu0 %v693
      %v888 = vpop.f32.mrb[0].mxu0
      %v889 = vadd.f32 %v638, %v888
      %v890 = vpop.f32.mrb[0].mxu0
      %891 = vmatprep.mubr.f32.mxu0 0.0
      %892 = vmatmul.mubr.f32.gmra.mrb[0].mxu0 %v696
      %v893 = vpop.f32.mrb[0].mxu0
      %v894 = vadd.f32 %v638, %v893
      %v895 = vpop.f32.mrb[0].mxu0
      %896 = vmatprep.mubr.f32.mxu0 0.0
      %897 = vmatmul.mubr.f32.gmra.mrb[0].mxu0 %v699
      %v898 = vpop.f32.mrb[0].mxu0
      %v899 = vadd.f32 %v638, %v898
      %v900 = vpop.f32.mrb[0].mxu0
      %901 = vmatprep.mubr.f32.mxu0 0.0
      %902 = vmatmul.mubr.f32.gmra.mrb[0].mxu0 %v702
      %v903 = vpop.f32.mrb[0].mxu0
      %v904 = vadd.f32 %v638, %v903
      %v905 = vpop.f32.mrb[0].mxu0
      %906 = vmatprep.mubr.f32.mxu0 0.0
      %907 = vmatmul.mubr.f32.gmra.mrb[0].mxu0 %v705
      %v908 = vpop.f32.mrb[0].mxu0
      %v909 = vadd.f32 %v638, %v908
      %v910 = vpop.f32.mrb[0].mxu0
      %911 = vmatprep.mubr.f32.mxu0 0.0
      %912 = vmatmul.mubr.f32.gmra.mrb[0].mxu0 %v708
      %v913 = vpop.f32.mrb[0].mxu0
      %v914 = vadd.f32 %v638, %v913
      %v915 = vpop.f32.mrb[0].mxu0
      %916 = vmatprep.mubr.f32.mxu0 0.0
      %917 = vmatmul.mubr.f32.gmra.mrb[0].mxu0 %v711
      %v918 = vpop.f32.mrb[0].mxu0
      %v919 = vadd.f32 %v638, %v918
      %v920 = vpop.f32.mrb[0].mxu0
      %921 = vmatprep.mubr.f32.mxu0 0.0
      %922 = vmatmul.mubr.f32.gmra.mrb[0].mxu0 %v714
      %v923 = vpop.f32.mrb[0].mxu0
      %v924 = vadd.f32 %v638, %v923
      %v925 = vpop.f32.mrb[0].mxu0
      %926 = vmatprep.mubr.f32.mxu0 0.0
      %927 = vmatmul.mubr.f32.gmra.mrb[0].mxu0 %v717
      %v928 = vpop.f32.mrb[0].mxu0
      %v929 = vadd.f32 %v638, %v928
      %v930 = vpop.f32.mrb[0].mxu0
      %931 = vmatprep.mubr.f32.mxu0 0.0
      %932 = vmatmul.mubr.f32.gmra.mrb[0].mxu0 %v720
      %v933 = vpop.f32.mrb[0].mxu0
      %v934 = vadd.f32 %v638, %v933
      %v935 = vpop.f32.mrb[0].mxu0
      %936 = vmatprep.mubr.f32.mxu0 0.0
      %937 = vmatmul.mubr.f32.gmra.mrb[0].mxu0 %v723
      %v938 = vpop.f32.mrb[0].mxu0
      %v939 = vadd.f32 %v638, %v938
      %v940 = vpop.f32.mrb[0].mxu0
      %941 = vmatprep.mubr.f32.mxu0 0.0
      %942 = vmatmul.mubr.f32.gmra.mrb[0].mxu0 %v726
      %v943 = vpop.f32.mrb[0].mxu0
      %v944 = vadd.f32 %v638, %v943
      %v945 = vpop.f32.mrb[0].mxu0
      %946 = vmatprep.mubr.f32.mxu0 0.0
      %947 = vmatmul.mubr.f32.gmra.mrb[0].mxu0 %v729
      %v948 = vpop.f32.mrb[0].mxu0
      %v949 = vadd.f32 %v638, %v948
      %v950 = vpop.f32.mrb[0].mxu0
      %951 = vmatprep.mubr.f32.mxu0 0.0
      %952 = vmatmul.mubr.f32.gmra.mrb[0].mxu0 %v732
      %v953 = vpop.f32.mrb[0].mxu0
      %v954 = vadd.f32 %v638, %v953
      %v955 = vpop.f32.mrb[0].mxu0
      %956 = vmatprep.mubr.f32.mxu0 0.0
      %957 = vmatmul.mubr.f32.gmra.mrb[0].mxu0 %v735
      %v958 = vpop.f32.mrb[0].mxu0
      %v959 = vadd.f32 %v638, %v958
      %v960 = vpop.f32.mrb[0].mxu0
      %961 = vdwg.mxu0
      %v962 = vmax.f32 %v804, 0.0
      %v963 = vmax.f32 %v809, 0.0
      %v964 = vmax.f32 %v814, 0.0
      %v965 = vmax.f32 %v819, 0.0
      %v966 = vmax.f32 %v824, 0.0
      %v967 = vmax.f32 %v829, 0.0
      %v968 = vmax.f32 %v834, 0.0
      %v969 = vmax.f32 %v839, 0.0
      %v970 = vmax.f32 %v844, 0.0
      %v971 = vmax.f32 %v849, 0.0
      %v972 = vmax.f32 %v854, 0.0
      %v973 = vmax.f32 %v859, 0.0
      %v974 = vmax.f32 %v864, 0.0
      %v975 = vmax.f32 %v869, 0.0
      %v976 = vmax.f32 %v874, 0.0
      %v977 = vmax.f32 %v879, 0.0
      %v978 = vmax.f32 %v884, 0.0
      %v979 = vmax.f32 %v889, 0.0
      %v980 = vmax.f32 %v894, 0.0
      %v981 = vmax.f32 %v899, 0.0
      %v982 = vmax.f32 %v904, 0.0
      %v983 = vmax.f32 %v909, 0.0
      %v984 = vmax.f32 %v914, 0.0
      %v985 = vmax.f32 %v919, 0.0
      %v986 = vmax.f32 %v924, 0.0
      %v987 = vmax.f32 %v929, 0.0
      %v988 = vmax.f32 %v934, 0.0
      %v989 = vmax.f32 %v939, 0.0
      %v990 = vmax.f32 %v944, 0.0
      %v991 = vmax.f32 %v949, 0.0
      %v992 = vmax.f32 %v954, 0.0
      %v993 = vmax.f32 %v959, 0.0
      %vm994 = vcmask 130048
      %995 = vst.msk [vmem:[%s226] sm:$0xff] %vm994, %v962
      %996 = vst.msk [vmem:[%s226 + $0x8] sm:$0xff] %vm994, %v963
      %997 = vst.msk [vmem:[%s226 + $0x10] sm:$0xff] %vm994, %v964
      %998 = vst.msk [vmem:[%s226 + $0x18] sm:$0xff] %vm994, %v965
      %999 = vst.msk [vmem:[%s226 + $0x20] sm:$0xff] %vm994, %v966
      %1000 = vst.msk [vmem:[%s226 + $0x28] sm:$0xff] %vm994, %v967
      %1001 = vst.msk [vmem:[%s226 + $0x30] sm:$0xff] %vm994, %v968
      %1002 = vst.msk [vmem:[%s226 + $0x38] sm:$0xff] %vm994, %v969
      %1003 = vst.msk [vmem:[%s226 + $0x40] sm:$0xff] %vm994, %v970
      %1004 = vst.msk [vmem:[%s226 + $0x48] sm:$0xff] %vm994, %v971
      %1005 = vst.msk [vmem:[%s226 + $0x50] sm:$0xff] %vm994, %v972
      %1006 = vst.msk [vmem:[%s226 + $0x58] sm:$0xff] %vm994, %v973
      %1007 = vst.msk [vmem:[%s226 + $0x60] sm:$0xff] %vm994, %v974
      %1008 = vst.msk [vmem:[%s226 + $0x68] sm:$0xff] %vm994, %v975
      %1009 = vst.msk [vmem:[%s226 + $0x70] sm:$0xff] %vm994, %v976
      %1010 = vst.msk [vmem:[%s226 + $0x78] sm:$0xff] %vm994, %v977
      %1011 = vst.msk [vmem:[%s226 + $0x80] sm:$0xff] %vm994, %v978
      %1012 = vst.msk [vmem:[%s226 + $0x88] sm:$0xff] %vm994, %v979
      %1013 = vst.msk [vmem:[%s226 + $0x90] sm:$0xff] %vm994, %v980
      %1014 = vst.msk [vmem:[%s226 + $0x98] sm:$0xff] %vm994, %v981
      %1015 = vst.msk [vmem:[%s226 + $0xa0] sm:$0xff] %vm994, %v982
      %1016 = vst.msk [vmem:[%s226 + $0xa8] sm:$0xff] %vm994, %v983
      %1017 = vst.msk [vmem:[%s226 + $0xb0] sm:$0xff] %vm994, %v984
      %1018 = vst.msk [vmem:[%s226 + $0xb8] sm:$0xff] %vm994, %v985
      %1019 = vst.msk [vmem:[%s226 + $0xc0] sm:$0xff] %vm994, %v986
      %1020 = vst.msk [vmem:[%s226 + $0xc8] sm:$0xff] %vm994, %v987
      %1021 = vst.msk [vmem:[%s226 + $0xd0] sm:$0xff] %vm994, %v988
      %1022 = vst.msk [vmem:[%s226 + $0xd8] sm:$0xff] %vm994, %v989
      %1023 = vst.msk [vmem:[%s226 + $0xe0] sm:$0xff] %vm994, %v990
      %1024 = vst.msk [vmem:[%s226 + $0xe8] sm:$0xff] %vm994, %v991
      %1025 = vst.msk [vmem:[%s226 + $0xf0] sm:$0xff] %vm994, %v992
      %1026 = vst.msk [vmem:[%s226 + $0xf8] sm:$0xff] %vm994, %v993
      %s1027 = smul.u32 32, %s16
      %p1028 = scmp.lt.s32.totalorder %s1027, 63
      %s1029 = scalar_select %p1028, %s1027, 63
      %s1030 = smul.addr %s1029, 8
      %s1031 = scalar_lea.vmem %s5, %s1030
      // Predicated region
      $region41: #{encoder_feature_linear.1} parent=39 // pred_check
        %p1032 = pneg %p144
      $region42: #{encoder_feature_linear.1} parent=39 // pred_check_branch
        %1034 = sbr.rel (%p1032) target = $region44
      $region43: #{encoder_feature_linear.1} parent=39 // pred_region
        %s1035 = smul.u32 32, %s16
      $region44: #{encoder_feature_linear.1} parent=39 // pred_fallthru
        _
    $region40: #{encoder_feature_linear.1} parent=5 // pred_fallthru
      _
    %p1036 = scmp.le.s32.totalorder 2, %s11
    // Predicated region
    $region45: #{encoder_feature_linear.1} parent=5 // pred_check
      %p1037 = pneg %p1036
    $region46: #{encoder_feature_linear.1} parent=5 // pred_check_branch
      %1039 = sbr.rel (%p1037) target = $region48
    $region47: #{encoder_feature_linear.1} parent=5 // pred_region
      %s1040 = ssub.s32 %s11, 2
      // Predicated region
      $region49: #{encoder_feature_linear.1} parent=47 // pred_check
        %p1041 = pneg %p150
      $region50: #{encoder_feature_linear.1} parent=47 // pred_check_branch
        %1043 = sbr.rel (%p1041) target = $region52
      $region51: #{encoder_feature_linear.1} parent=47 // pred_region
        %s1044 = smul.u32 32, %s17
        %p1045 = scmp.lt.s32.totalorder %s1044, 63
        %s1046 = scalar_select %p1045, %s1044, 63
        %s1047 = smul.addr %s1046, 8
        %s1048 = scalar_lea.vmem %s5, %s1047
      $region52: #{encoder_feature_linear.1} parent=47 // pred_fallthru
        _
    $region48: #{encoder_feature_linear.1} parent=5 // pred_fallthru
      _
  $region6: #{encoder_feature_linear.1} parent=0 // loop_footer
    %s15 = sadd.s32 1, %s11
  $region7: #{encoder_feature_linear.1} parent=0 // loop_footer_branch
    %10 = sbr.rel target = $region3
  $region8: #{encoder_feature_linear.1} parent=0 // loop_exit
    _

</llo_original>
